<compile_context>
chip_gen: v5e
topology: v5e:2x2
jax: 0.10.0
libtpu: 0.0.40
codegen_flags: <defaults>
</compile_context>

<pallas_src>
import functools

import jax
import jax.numpy as jnp
from jax.experimental import pallas as pl
from jax.experimental.pallas import tpu as pltpu


def _round_up(x, m):
    return ((x + m - 1) // m) * m


def _kd_loss_kernel(s_ref, t_ref, out_ref, *, inv_temperature):
    # One row tile (tm, C) of student / teacher logits; all math in f32 (VPU/EUP).
    s = s_ref[...].astype(jnp.float32) * inv_temperature
    t = t_ref[...].astype(jnp.float32) * inv_temperature

    # log_softmax(student / T) along the class (lane) axis.
    s_shift = s - jnp.max(s, axis=-1, keepdims=True)
    s_lse = jnp.log(jnp.sum(jnp.exp(s_shift), axis=-1, keepdims=True))
    log_ps = s_shift - s_lse

    # softmax(teacher / T) and its log.
    t_shift = t - jnp.max(t, axis=-1, keepdims=True)
    t_exp = jnp.exp(t_shift)
    log_t_sum = jnp.log(jnp.sum(t_exp, axis=-1, keepdims=True))
    log_pt = t_shift - log_t_sum
    # Fold the normalization through the already-computed log: a (tm,1) EUP exp plus a
    # broadcast VPU multiply instead of an exact per-element divide (VALU iterations).
    p_t = t_exp * jnp.exp(-log_t_sum)

    # This tile's contribution to kl_div(..., reduction='sum').
    # Zero-padded rows (student == teacher == 0) contribute exactly 0.
    kl_tile = jnp.sum(p_t * (log_pt - log_ps))

    # Per-tile partial into its own (8,128) output block (scalar at [0,0], zeros elsewhere).
    # No resident accumulator -> the batch grid axis can be 'parallel'.
    sub = jax.lax.broadcasted_iota(jnp.int32, (8, 128), 0)
    lane = jax.lax.broadcasted_iota(jnp.int32, (8, 128), 1)
    out_ref[...] = jnp.where((sub == 0) & (lane == 0), kl_tile, 0.0).reshape(1, 8, 128)


def knowledge_distillation_loss(student_logit, teacher_logit, temperature=4.0, tm=None):
    """Pallas TPU implementation of KnowledgeDistillationLoss.forward for 2-D logits (N, C)."""
    assert student_logit.shape == teacher_logit.shape
    assert student_logit.ndim == 2
    n, c = student_logit.shape

    itemsize = max(jnp.dtype(student_logit.dtype).itemsize,
                   jnp.dtype(teacher_logit.dtype).itemsize)

    # Row tile: target ~2 MiB per input block (memory-bound kernel; big tiles amortize the
    # per-grid-step overhead). Multiple of 16 so bf16 inputs also satisfy the (16,128) tile.
    if tm is None:
        target_block_bytes = 2 * 1024 * 1024
        tm = target_block_bytes // max(1, c * itemsize)
    tm = min(int(tm), _round_up(n, 16))
    tm = max(16, (tm // 16) * 16)

    # Pad the batch so the grid divides evenly; identical zero padding of both inputs adds
    # exactly 0 to the KL sum, so no in-kernel masking is required.
    n_padded = _round_up(n, tm)
    if n_padded != n:
        pad = ((0, n_padded - n), (0, 0))
        student_logit = jnp.pad(student_logit, pad)
        teacher_logit = jnp.pad(teacher_logit, pad)
    num_tiles = n_padded // tm

    # VMEM budget: 2 inputs x double-buffered blocks + slack; raise the scoped limit so the
    # larger tiles compile on every generation (kept well under v7x's 64 MiB physical).
    block_bytes = tm * c * itemsize
    vmem_limit = int(max(4 * block_bytes + (2 << 20), 32 << 20))

    kernel = functools.partial(_kd_loss_kernel, inv_temperature=1.0 / float(temperature))

    # TODO(synk): for vocab-scale C, add a second grid axis over classes with an
    # online-softmax accumulation so per-block VMEM stays bounded.
    partials = pl.pallas_call(
        kernel,
        out_shape=jax.ShapeDtypeStruct((num_tiles, 8, 128), jnp.float32),
        grid_spec=pltpu.PrefetchScalarGridSpec(
            num_scalar_prefetch=0,
            grid=(num_tiles,),
            in_specs=[
                pl.BlockSpec((tm, c), lambda i: (i, 0)),
                pl.BlockSpec((tm, c), lambda i: (i, 0)),
            ],
            out_specs=pl.BlockSpec((1, 8, 128), lambda i: (i, 0, 0)),
        ),
        compiler_params=pltpu.CompilerParams(
            dimension_semantics=("parallel",),   # independent per-tile partials
            vmem_limit_bytes=vmem_limit,
        ),
    )(student_logit, teacher_logit)

    # Tiny final reduction + reduction='sum' / batch-size in plain JAX.
    return jnp.sum(partials) / jnp.float32(n)


def _reference_kd_loss(student_logit, teacher_logit, temperature=4.0):
    s = student_logit.astype(jnp.float32) / temperature
    t = teacher_logit.astype(jnp.float32) / temperature
    log_ps = jax.nn.log_softmax(s, axis=-1)
    p_t = jax.nn.softmax(t, axis=-1)
    log_pt = jax.nn.log_softmax(t, axis=-1)
    return jnp.sum(p_t * (log_pt - log_ps)) / student_logit.shape[0]


if __name__ == "__main__":
    key = jax.random.PRNGKey(0)
    k1, k2, k3, k4 = jax.random.split(key, 4)

    # Case 1: small aligned shapes (batch=8, classes=128), f32 logits.
    s1 = jax.random.normal(k1, (8, 128), dtype=jnp.float32) * 3.0
    t1 = jax.random.normal(k2, (8, 128), dtype=jnp.float32) * 3.0
    out1 = jax.block_until_ready(knowledge_distillation_loss(s1, t1, temperature=4.0))
    ref1 = _reference_kd_loss(s1, t1, temperature=4.0)
    assert jnp.allclose(out1, ref1, rtol=2e-4, atol=1e-5), (out1, ref1)

    # Case 2: ragged batch / non-128 class count, bf16 logits (halved-HBM-traffic path).
    s2 = (jax.random.normal(k3, (24, 100), dtype=jnp.float32) * 3.0).astype(jnp.bfloat16)
    t2 = (jax.random.normal(k4, (24, 100), dtype=jnp.float32) * 3.0).astype(jnp.bfloat16)
    out2 = jax.block_until_ready(knowledge_distillation_loss(s2, t2, temperature=4.0))
    ref2 = _reference_kd_loss(s2, t2, temperature=4.0)
    assert jnp.allclose(out2, ref2, rtol=2e-4, atol=1e-5), (out2, ref2)

    print("KERNEL_OK")
</pallas_src>

<mosaic_0001>
module attributes {stable_mosaic.version = 11 : i64} {
  func.func @_kd_loss_kernel(%arg0: i32, %arg1: memref<16x128xf32, #tpu.memory_space<vmem>>, %arg2: memref<16x128xf32, #tpu.memory_space<vmem>>, %arg3: memref<1x8x128xf32, #tpu.memory_space<vmem>>) attributes {dimension_semantics = [#tpu.dimension_semantics<parallel>], iteration_bounds = array<i64: 1>, scalar_prefetch = 0 : i64, scratch_operands = 0 : i64, tpu.core_type = #tpu.core_type<tc>, window_params = [{transform_indices = @transform_0, window_bounds = array<i64: 16, 128>}, {transform_indices = @transform_1, window_bounds = array<i64: 16, 128>}, {transform_indices = @transform_2, window_bounds = array<i64: 1, 8, 128>}]} {
    %c0 = arith.constant 0 : index
    %c0_0 = arith.constant 0 : index
    %0 = vector.load %arg1[%c0, %c0_0] : memref<16x128xf32, #tpu.memory_space<vmem>>, vector<16x128xf32>
    %cst = arith.constant 2.500000e-01 : f32
    %1 = vector.broadcast %cst : f32 to vector<16x128xf32>
    %2 = arith.mulf %0, %1 : vector<16x128xf32>
    %c0_1 = arith.constant 0 : index
    %c0_2 = arith.constant 0 : index
    %3 = vector.load %arg2[%c0_1, %c0_2] : memref<16x128xf32, #tpu.memory_space<vmem>>, vector<16x128xf32>
    %cst_3 = arith.constant 2.500000e-01 : f32
    %4 = vector.broadcast %cst_3 : f32 to vector<16x128xf32>
    %5 = arith.mulf %3, %4 : vector<16x128xf32>
    %cst_4 = arith.constant dense<0xFF800000> : vector<16xf32>
    %6 = vector.multi_reduction <maximumf>, %2, %cst_4 [1] : vector<16x128xf32> to vector<16xf32>
    %7 = vector.shape_cast %6 : vector<16xf32> to vector<16x1xf32>
    %8 = vector.broadcast %7 : vector<16x1xf32> to vector<16x128xf32>
    %9 = arith.subf %2, %8 : vector<16x128xf32>
    %10 = math.exp %9 : vector<16x128xf32>
    %cst_5 = arith.constant dense<0.000000e+00> : vector<16xf32>
    %11 = vector.multi_reduction <add>, %10, %cst_5 [1] : vector<16x128xf32> to vector<16xf32>
    %12 = vector.shape_cast %11 : vector<16xf32> to vector<16x1xf32>
    %13 = math.log %12 : vector<16x1xf32>
    %14 = vector.broadcast %13 : vector<16x1xf32> to vector<16x128xf32>
    %15 = arith.subf %9, %14 : vector<16x128xf32>
    %cst_6 = arith.constant dense<0xFF800000> : vector<16xf32>
    %16 = vector.multi_reduction <maximumf>, %5, %cst_6 [1] : vector<16x128xf32> to vector<16xf32>
    %17 = vector.shape_cast %16 : vector<16xf32> to vector<16x1xf32>
    %18 = vector.broadcast %17 : vector<16x1xf32> to vector<16x128xf32>
    %19 = arith.subf %5, %18 : vector<16x128xf32>
    %20 = math.exp %19 : vector<16x128xf32>
    %cst_7 = arith.constant dense<0.000000e+00> : vector<16xf32>
    %21 = vector.multi_reduction <add>, %20, %cst_7 [1] : vector<16x128xf32> to vector<16xf32>
    %22 = vector.shape_cast %21 : vector<16xf32> to vector<16x1xf32>
    %23 = math.log %22 : vector<16x1xf32>
    %24 = vector.broadcast %23 : vector<16x1xf32> to vector<16x128xf32>
    %25 = arith.subf %19, %24 : vector<16x128xf32>
    %cst_8 = arith.constant 0.000000e+00 : f32
    %26 = vector.broadcast %cst_8 : f32 to vector<16x1xf32>
    %27 = arith.subf %26, %23 : vector<16x1xf32>
    %28 = math.exp %27 : vector<16x1xf32>
    %29 = vector.broadcast %28 : vector<16x1xf32> to vector<16x128xf32>
    %30 = arith.mulf %20, %29 : vector<16x128xf32>
    %31 = arith.subf %25, %15 : vector<16x128xf32>
    %32 = arith.mulf %30, %31 : vector<16x128xf32>
    %33 = vector.shape_cast %32 : vector<16x128xf32> to vector<1x16x128xf32>
    %cst_9 = arith.constant dense<0.000000e+00> : vector<1xf32>
    %34 = vector.multi_reduction <add>, %33, %cst_9 [1, 2] : vector<1x16x128xf32> to vector<1xf32>
    %35 = vector.shape_cast %34 : vector<1xf32> to vector<1x1x1xf32>
    %36 = vector.extract %35[0, 0, 0] : f32 from vector<1x1x1xf32>
    %37 = tpu.iota {dimensions = array<i32: 0>} : vector<8x128xi32>
    %38 = tpu.iota {dimensions = array<i32: 1>} : vector<8x128xi32>
    %c0_i32 = arith.constant 0 : i32
    %39 = vector.broadcast %c0_i32 : i32 to vector<8x128xi32>
    %40 = arith.cmpi eq, %37, %39 : vector<8x128xi32>
    %c0_i32_10 = arith.constant 0 : i32
    %41 = vector.broadcast %c0_i32_10 : i32 to vector<8x128xi32>
    %42 = arith.cmpi eq, %38, %41 : vector<8x128xi32>
    %43 = arith.andi %40, %42 : vector<8x128xi1>
    %cst_11 = arith.constant 0.000000e+00 : f32
    %44 = vector.broadcast %36 : f32 to vector<8x128xf32>
    %45 = vector.broadcast %cst_11 : f32 to vector<8x128xf32>
    %46 = arith.select %43, %44, %45 : vector<8x128xi1>, vector<8x128xf32>
    %47 = vector.shape_cast %46 : vector<8x128xf32> to vector<1x8x128xf32>
    %c0_12 = arith.constant 0 : index
    %c0_13 = arith.constant 0 : index
    %c0_14 = arith.constant 0 : index
    %48 = vector.load %arg3[%c0_12, %c0_13, %c0_14] : memref<1x8x128xf32, #tpu.memory_space<vmem>>, vector<1x8x128xf32>
    tpu.vector_store %arg3[%c0_12, %c0_13, %c0_14], %47 {strides = array<i32>} : memref<1x8x128xf32, #tpu.memory_space<vmem>>, vector<1x8x128xf32>,
    return
  }
  func.func @transform_0(%arg0: i32) -> (i32, i32) {
    %c0_i32 = arith.constant 0 : i32
    %c0_i32_0 = arith.constant 0 : i32
    return %arg0, %c0_i32 : i32, i32
  }
  func.func @transform_1(%arg0: i32) -> (i32, i32) {
    %c0_i32 = arith.constant 0 : i32
    %c0_i32_0 = arith.constant 0 : i32
    return %arg0, %c0_i32 : i32, i32
  }
  func.func @transform_2(%arg0: i32) -> (i32, i32, i32) {
    %c0_i32 = arith.constant 0 : i32
    %c0_i32_0 = arith.constant 0 : i32
    %c0_i32_1 = arith.constant 0 : i32
    return %arg0, %c0_i32, %c0_i32_0 : i32, i32, i32
  }
}

</mosaic_0001>

<llo_original>
// kernel: tpu_custom_call.1
$region0: #{tpu_custom_call.1}
  #allocation0 [shape = 'u32[]', space=smem, size = 0x4, offset = 0x4, fixed_abs, tag = 'smem constant byte address 0x4 - core index']
  #allocation1 [shape = 'u32[72,128]{1,0:T(1,128)}', space=vmem, size = 0x9000, scoped, tag = 'internal scratch']
  %s0 = inlined_call_operand.hbm [shape: f32[16,128], index: 0, kind: input, shape index: {}]
  %s1 = inlined_call_operand.hbm [shape: f32[16,128], index: 1, kind: input, shape index: {}]
  %s2 = inlined_call_operand.hbm [shape: f32[1,8,128], index: 2, kind: output, shape index: {}]
  %s3 = sld [smem:[#allocation0]]
  $region26: #{tpu_custom_call.1} parent=0
    _
  %s5 = ssub.s32 1, %s3
  %s6 = scalar_select 0, %s5, %s3
  $region1: #{tpu_custom_call.1} parent=0
    #allocation2 [shape = 'u8[8192]{0}', space=vmem, size = 0x2000, scoped, tag = 'input window, operand 0, single buffered']
    #allocation3 [shape = 's32[1]{0}', space=sflag, size = 0x4, scoped, tag = 'scoped memory for tpu_custom_call.1']
    #allocation4 [shape = 's32[1]{0}', space=sflag, size = 0x4, scoped, tag = 'scoped memory for tpu_custom_call.1']
    #allocation5 [shape = 'u8[8192]{0}', space=vmem, size = 0x2000, scoped, tag = 'input window, operand 1, single buffered']
    #allocation6 [shape = 's32[1]{0}', space=sflag, size = 0x4, scoped, tag = 'scoped memory for tpu_custom_call.1']
    #allocation7 [shape = 'u8[4096]{0}', space=vmem, size = 0x1000, scoped, tag = 'output window, operand 0, single buffered']
    %7 = vsyncpa [#allocation3], 0
    %8 = vsyncpa [#allocation6], 0
    %9 = vsyncpa [#allocation4], 0
    // Predicated region
    $region2: #{tpu_custom_call.1} parent=1 // pred_check
      _
    $region3: #{tpu_custom_call.1} parent=1 // pred_check_branch
      %11 = sbr.rel (0) target = $region5
    $region4: #{tpu_custom_call.1} parent=1 // pred_region
      %13 = vsyncadd [#allocation3], 0
      %s14 = sshll.u32 %s0, 4
      %s15 = int_to_ptr.hbm [resolvable:$true] %s14
      %s16 = sshll.u32 [#allocation2], 4
      %s17 = int_to_ptr.vmem [resolvable:$true] %s16
      %22 = dma.hbm_to_vmem [thread:$0]  %s15, 256, %s17, [#allocation3], 128, 128, 8
    $region5: #{tpu_custom_call.1} parent=1 // pred_fallthru
      _
    // Predicated region
    $region6: #{tpu_custom_call.1} parent=1 // pred_check
      _
    $region7: #{tpu_custom_call.1} parent=1 // pred_check_branch
      %24 = sbr.rel (0) target = $region9
    $region8: #{tpu_custom_call.1} parent=1 // pred_region
      %26 = vsyncadd [#allocation6], 0
      %s27 = sshll.u32 %s1, 4
      %s28 = int_to_ptr.hbm [resolvable:$true] %s27
      %s29 = sshll.u32 [#allocation5], 4
      %s30 = int_to_ptr.vmem [resolvable:$true] %s29
      %35 = dma.hbm_to_vmem [thread:$0]  %s28, 256, %s30, [#allocation6], 128, 128, 8
    $region9: #{tpu_custom_call.1} parent=1 // pred_fallthru
      _
    // Predicated region
    $region10: #{tpu_custom_call.1} parent=1 // pred_check
      _
    $region11: #{tpu_custom_call.1} parent=1 // pred_check_branch
      %37 = sbr.rel (0) target = $region13
    $region12: #{tpu_custom_call.1} parent=1 // pred_region
      %39 = dma.done [#allocation3], 256
    $region13: #{tpu_custom_call.1} parent=1 // pred_fallthru
      _
    // Predicated region
    $region14: #{tpu_custom_call.1} parent=1 // pred_check
      _
    $region15: #{tpu_custom_call.1} parent=1 // pred_check_branch
      %41 = sbr.rel (0) target = $region17
    $region16: #{tpu_custom_call.1} parent=1 // pred_region
      %43 = dma.done [#allocation6], 256
    $region17: #{tpu_custom_call.1} parent=1 // pred_fallthru
      _
    %v44 = vld [vmem:[#allocation2] sm:$0xff]
    %v45 = vld [vmem:[#allocation2 + $0x8] sm:$0xff]
    %v46 = vmul.f32 %v44, 0.25
    %v47 = vmul.f32 %v45, 0.25
    %v48 = vld [vmem:[#allocation5] sm:$0xff]
    %v49 = vld [vmem:[#allocation5 + $0x8] sm:$0xff]
    %v50 = vmul.f32 %v48, 0.25
    %v51 = vmul.f32 %v49, 0.25
    %52 = vmax.xlane.f32.xlu0 %v46
    %v53 = vpop.xlane.xlu0 %52
    %54 = vmax.xlane.f32.xlu0 %v47
    %v55 = vpop.xlane.xlu0 %54
    %v56 = vsub.f32 %v46, %v53
    %v57 = vsub.f32 %v47, %v55
    %v58 = vmul.f32 %v56, 1.442695
    %v59 = vpow.pop %v58
    %v60 = vmul.f32 %v57, 1.442695
    %v61 = vpow.pop %v60
    %62 = vadd.xlane.f32.xlu0 %v59
    %v63 = vpop.xlane.xlu0 %62
    %64 = vadd.xlane.f32.xlu0 %v61
    %v65 = vpop.xlane.xlu0 %64
    %v66 = vlog2.pop %v63
    %v67 = vmul.f32 %v66, 0.6931472
    %v68 = vlog2.pop %v65
    %v69 = vmul.f32 %v68, 0.6931472
    %v70 = vsub.f32 %v56, %v67
    %v71 = vsub.f32 %v57, %v69
    %72 = vmax.xlane.f32.xlu0 %v50
    %v73 = vpop.xlane.xlu0 %72
    %74 = vmax.xlane.f32.xlu0 %v51
    %v75 = vpop.xlane.xlu0 %74
    %v76 = vsub.f32 %v50, %v73
    %v77 = vsub.f32 %v51, %v75
    %v78 = vmul.f32 %v76, 1.442695
    %v79 = vpow.pop %v78
    %v80 = vmul.f32 %v77, 1.442695
    %v81 = vpow.pop %v80
    %82 = vadd.xlane.f32.xlu0 %v79
    %v83 = vpop.xlane.xlu0 %82
    %84 = vadd.xlane.f32.xlu0 %v81
    %v85 = vpop.xlane.xlu0 %84
    %v86 = vlog2.pop %v83
    %v87 = vmul.f32 %v86, 0.6931472
    %v88 = vlog2.pop %v85
    %v89 = vmul.f32 %v88, 0.6931472
    %v90 = vsub.f32 %v76, %v87
    %v91 = vsub.f32 %v77, %v89
    %v92 = vsub.f32 0.0, %v87
    %v93 = vsub.f32 0.0, %v89
    %v94 = vmul.f32 %v92, 1.442695
    %v95 = vpow.pop %v94
    %v96 = vmul.f32 %v93, 1.442695
    %v97 = vpow.pop %v96
    %v98 = vmul.f32 %v79, %v95
    %v99 = vmul.f32 %v81, %v97
    %v100 = vsub.f32 %v90, %v70
    %v101 = vsub.f32 %v91, %v71
    %v102 = vmul.f32 %v98, %v100
    %v103 = vmul.f32 %v99, %v101
    %v104 = vadd.f32 %v102, %v103
    %105 = vadd.xlane.f32.xlu0 %v104
    %v106 = vpop.xlane.xlu0 %105
    %v107 = vrot.slane %v106, 4
    %v108 = vadd.f32 %v106, %v107
    %v109 = vrot.slane %v108, 2
    %v110 = vadd.f32 %v108, %v109
    %v111 = vrot.slane %v110, 1
    %v112 = vadd.f32 %v110, %v111
    %s113 = vtos %v112
    %v114 = vlaneseq
    %v115 = vshrl.u32 %v114, 7
    %v116 = vlaneseq
    %v117 = vand.u32 %v116, 127
    %vm118 = vcmp.eq.s32.totalorder %v115, 0
    %vm119 = vcmp.eq.s32.totalorder %v117, 0
    %vm120 = vmand %vm118, %vm119
    %v121 = vstv %s113
    %v122 = vsel %vm120, %v121, 0.0
    %123 = vst [vmem:[#allocation7] sm:$0xff] %v122
    // Predicated region
    $region18: #{tpu_custom_call.1} parent=1 // pred_check
      _
    $region19: #{tpu_custom_call.1} parent=1 // pred_check_branch
      %125 = sbr.rel (0) target = $region21
    $region20: #{tpu_custom_call.1} parent=1 // pred_region
      %127 = vsyncadd [#allocation4], 0
      %s129 = sshll.u32 [#allocation7], 4
      %s130 = int_to_ptr.vmem [resolvable:$true] %s129
      %s131 = sshll.u32 %s2, 4
      %s132 = int_to_ptr.hbm [resolvable:$true] %s131
      %134 = dma.vmem_to_hbm [thread:$0]  %s130, 128, %s132, [#allocation4]
    $region21: #{tpu_custom_call.1} parent=1 // pred_fallthru
      _
    // Predicated region
    $region22: #{tpu_custom_call.1} parent=1 // pred_check
      _
    $region23: #{tpu_custom_call.1} parent=1 // pred_check_branch
      %136 = sbr.rel (0) target = $region25
    $region24: #{tpu_custom_call.1} parent=1 // pred_region
      %138 = dma.done [#allocation4], 128
    $region25: #{tpu_custom_call.1} parent=1 // pred_fallthru
      _
    %139 = vsyncpa [#allocation3], 1
    %140 = vsyncpa [#allocation6], 1
    %141 = vsyncpa [#allocation4], 1

</llo_original>
